<compile_context>
chip_gen: v6e
topology: v6e:2x2x1
jax: 0.10.0
libtpu: 0.0.40
codegen_flags: <defaults>
</compile_context>

<pallas_src>
import functools
from typing import NamedTuple

import jax
import jax.numpy as jnp
from jax.experimental import pallas as pl
from jax.experimental.pallas import tpu as pltpu


def _round_up(x, m):
    return (x + m - 1) // m * m


# --------------------------------------------------------------------------
# Parameter preparation (run once at load time — hoisted out of the hot path)
# --------------------------------------------------------------------------
class Qwen3MoeMLPParams(NamedTuple):
    gu_w: jax.Array       # (2, H, I_pad): gate weights at [0], up weights at [1]
    down_w: jax.Array     # (I_pad, H)
    hidden_size: int
    intermediate_size: int  # un-padded I


def prepare_qwen3_moe_mlp_params(gate_w, up_w, down_w):
    """gate_w/up_w: [H, I], down_w: [I, H] (math layout = torch weight.T)."""
    H, I = gate_w.shape
    assert up_w.shape == (H, I) and down_w.shape == (I, H)
    I_pad = _round_up(I, 128)
    if I_pad != I:
        # Zero intermediate columns contribute silu(0)*0 = 0 to the down
        # projection, so semantics are exact.
        gate_w = jnp.pad(gate_w, ((0, 0), (0, I_pad - I)))
        up_w = jnp.pad(up_w, ((0, 0), (0, I_pad - I)))
        down_w = jnp.pad(down_w, ((0, I_pad - I), (0, 0)))
    gu_w = jnp.stack([gate_w, up_w], axis=0)           # (2, H, I_pad)
    return Qwen3MoeMLPParams(gu_w=gu_w, down_w=down_w,
                             hidden_size=H, intermediate_size=I)


# --------------------------------------------------------------------------
# Kernel
# --------------------------------------------------------------------------
def _mlp_kernel(x_ref, gu_ref, dw_ref, o_ref, *scratch, n_reduce):
    x = x_ref[...]
    g = jnp.dot(x, gu_ref[0], preferred_element_type=jnp.float32)
    u = jnp.dot(x, gu_ref[1], preferred_element_type=jnp.float32)
    # SiLU in f32 (sigmoid rides the EUP slot, essentially free under MXU work)
    h = (g * jax.nn.sigmoid(g)) * u
    part = jnp.dot(h.astype(dw_ref.dtype), dw_ref[...],
                   preferred_element_type=jnp.float32)

    if n_reduce == 1:
        # Weights resident (or single reduction step): write straight to the
        # output tile — no accumulator zero-init / += / final cast pass.
        o_ref[...] = part.astype(o_ref.dtype)
    else:
        acc_ref, = scratch
        j = pl.program_id(1)

        @pl.when(j == 0)
        def _():
            acc_ref[...] = jnp.zeros_like(acc_ref)

        acc_ref[...] += part

        @pl.when(j == n_reduce - 1)
        def _():
            o_ref[...] = acc_ref[...].astype(o_ref.dtype)


# --------------------------------------------------------------------------
# Tiling / VMEM heuristics
# --------------------------------------------------------------------------
def _device_kind():
    try:
        return jax.devices()[0].device_kind.lower()
    except Exception:
        return ""


def _looks_like_v7x(kind):
    return ("tpu" in kind) and ("7" in kind)


def _vmem_capacity_bytes(kind):
    cap = None
    try:
        cap = int(pltpu.get_tpu_info().vmem_capacity_bytes)
    except Exception:
        cap = None
    if cap is None or cap <= 0:
        cap = 64 * 1024 * 1024
    if _looks_like_v7x(kind):
        # v7x VMEM is 64 MiB *per TensorCore* — never size for a per-chip
        # (2-core) figure even if the query reports one.
        cap = min(cap, 64 * 1024 * 1024)
    return min(cap, 128 * 1024 * 1024)


def _choose_token_tile(T, act_bytes, cap):
    sub = 8 if act_bytes >= 4 else (16 if act_bytes == 2 else 32)
    cap = max(sub, _round_up(cap, sub))
    if T >= 2 * cap:
        return cap
    if T > sub:
        # Split into >= 2 token tiles whenever T allows so the "parallel" grid
        # axis can feed both v7x TensorCores / overlap DMA with compute.
        return min(cap, _round_up((T + 1) // 2, sub))
    return _round_up(max(T, 1), sub)


def _weights_resident(H, I_pad, tm, act_bytes, w_bytes, budget):
    need = (4 * tm * H * act_bytes                        # x + out tiles, dbl-buffered
            + 2 * (2 * H * I_pad + I_pad * H) * w_bytes   # gu + down blocks (2 bufs)
            + 3 * tm * I_pad * 4)                         # g/u/h f32 temporaries
    return need <= budget


def _streamed_ti(I_span, H, tm, act_bytes, w_bytes, budget):
    """Largest multiple of 128 that divides I_span (no extra padding) and whose
    double-buffered working set fits the VMEM budget."""
    n128 = max(1, I_span // 128)
    for mult in range(min(n128, 16), 0, -1):
        ti = mult * 128
        if I_span % ti != 0:
            continue
        need = (4 * tm * H * act_bytes
                + 2 * (2 * H * ti + ti * H) * w_bytes
                + tm * H * 4                # f32 accumulator
                + 3 * tm * ti * 4)          # g/u/h temporaries
        if need <= budget:
            return ti
    return 128


# --------------------------------------------------------------------------
# Forward pass
# --------------------------------------------------------------------------
def qwen3_moe_mlp(x, params: Qwen3MoeMLPParams, *, tm=None,
                  vmem_limit_bytes=None, decode_split=None):
    """x: [..., H].  Returns [..., H]."""
    H = params.hidden_size
    gu_w, down_w = params.gu_w, params.down_w
    I_pad = down_w.shape[0]

    orig_shape = x.shape
    x2 = x.reshape(-1, H)
    T = x2.shape[0]

    act_bytes = jnp.dtype(x2.dtype).itemsize
    w_bytes = jnp.dtype(gu_w.dtype).itemsize

    kind = _device_kind()
    if vmem_limit_bytes is None:
        vmem_limit_bytes = int(_vmem_capacity_bytes(kind) * 0.75)
    vmem_limit_bytes = int(vmem_limit_bytes)
    budget = int(vmem_limit_bytes * 0.85)

    # Token tile.
    if tm is None:
        tm = _choose_token_tile(T, act_bytes, 256)
        resident = _weights_resident(H, I_pad, tm, act_bytes, w_bytes, budget)
        if not resident:
            # Weight-streaming regime: larger token tiles halve the per-token
            # weight re-read (v6e needs ~700 flops/byte to be compute-bound).
            tm = _choose_token_tile(T, act_bytes, 512)
    else:
        resident = _weights_resident(H, I_pad, tm, act_bytes, w_bytes, budget)

    T_pad = _round_up(T, tm)
    if T_pad != T:
        x2 = jnp.pad(x2, ((0, T_pad - T), (0, 0)))   # zero tokens -> zero output rows
    grid_m = T_pad // tm

    # Decode on v7x: split the intermediate reduction across the two TensorCores.
    if decode_split is None:
        decode_split = _looks_like_v7x(kind)
    use_split = bool(decode_split) and grid_m == 1 and (I_pad % 256 == 0)

    weight_hbm_bytes = (2 * H * I_pad + I_pad * H) * w_bytes

    if use_split:
        n_split = 2
        I_half = I_pad // 2
        ti = _streamed_ti(I_half, H, tm, act_bytes, w_bytes, budget)
        n_inner = I_half // ti
        grid = (n_split, n_inner)

        in_specs = [
            pl.BlockSpec((tm, H), lambda s, k: (0, 0)),
            pl.BlockSpec((2, H, ti),
                         lambda s, k, n_inner=n_inner: (0, 0, s * n_inner + k)),
            pl.BlockSpec((ti, H),
                         lambda s, k, n_inner=n_inner: (s * n_inner + k, 0)),
        ]
        out_shape = jax.ShapeDtypeStruct((n_split, tm, H), jnp.float32)
        out_specs = pl.BlockSpec((None, tm, H), lambda s, k: (s, 0, 0))
        n_reduce = n_inner
        out_hbm_bytes = n_split * tm * H * 4
        # Each core streams half the weights -> full weight set read once total.
    else:
        ti = I_pad if resident else _streamed_ti(I_pad, H, tm, act_bytes,
                                                 w_bytes, budget)
        n_i = I_pad // ti
        grid = (grid_m, n_i)

        in_specs = [
            pl.BlockSpec((tm, H), lambda i, j: (i, 0)),
            pl.BlockSpec((2, H, ti), lambda i, j: (0, 0, j)),
            pl.BlockSpec((ti, H), lambda i, j: (j, 0)),
        ]
        out_shape = jax.ShapeDtypeStruct((T_pad, H), x.dtype)
        out_specs = pl.BlockSpec((tm, H), lambda i, j: (i, 0))
        n_reduce = n_i
        out_hbm_bytes = T_pad * H * act_bytes
        # n_i == 1 -> weight index_maps are grid-invariant -> DMA'd exactly once.
        if n_i > 1:
            weight_hbm_bytes *= grid_m

    scratch_shapes = [] if n_reduce == 1 else [pltpu.VMEM((tm, H), jnp.float32)]

    cost = pl.CostEstimate(
        flops=int(6 * T_pad * H * I_pad),
        transcendentals=int(T_pad * I_pad),
        bytes_accessed=int(T_pad * H * act_bytes + out_hbm_bytes
                           + weight_hbm_bytes),
    )

    out = pl.pallas_call(
        functools.partial(_mlp_kernel, n_reduce=n_reduce),
        out_shape=out_shape,
        grid_spec=pltpu.PrefetchScalarGridSpec(
            num_scalar_prefetch=0,
            grid=grid,
            in_specs=in_specs,
            out_specs=out_specs,
            scratch_shapes=scratch_shapes,
        ),
        compiler_params=pltpu.CompilerParams(
            dimension_semantics=("parallel", "arbitrary"),
            vmem_limit_bytes=vmem_limit_bytes,
        ),
        cost_estimate=cost,
    )(x2, gu_w, down_w)

    if use_split:
        out = out.sum(axis=0).astype(x.dtype)
    if T_pad != T:
        out = out[:T]
    return out.reshape(orig_shape)


# --------------------------------------------------------------------------
# Tests
# --------------------------------------------------------------------------
def _reference(x, gate_w, up_w, down_w):
    g = x @ gate_w
    u = x @ up_w
    return (jax.nn.silu(g) * u) @ down_w


if __name__ == "__main__":
    key = jax.random.PRNGKey(0)

    # Small, deterministic Qwen3MoeConfig-like setup: hidden_size=64,
    # intermediate_size=128, hidden_act="silu". Input is [batch, seq, hidden].
    # For real Qwen3 shapes pass bf16 weights/activations (MXU fast path).
    H, I = 64, 128
    kx, kg, ku, kd = jax.random.split(key, 4)
    gate_w = jax.random.normal(kg, (H, I), jnp.float32) * 0.05
    up_w = jax.random.normal(ku, (H, I), jnp.float32) * 0.05
    down_w = jax.random.normal(kd, (I, H), jnp.float32) * 0.05

    # Weight prep happens once (hoisted out of the per-call hot path).
    params_f32 = prepare_qwen3_moe_mlp_params(gate_w, up_w, down_w)

    # 1) float32 path, even token count (weight-resident, n_i == 1), tight check.
    x = jax.random.normal(kx, (2, 8, H), dtype=jnp.float32)
    out = jax.block_until_ready(qwen3_moe_mlp(x, params_f32))
    ref = _reference(x, gate_w, up_w, down_w)
    assert out.shape == x.shape
    assert jnp.allclose(out, ref, atol=1e-4, rtol=1e-4), "f32 mismatch vs reference"

    # 2) bfloat16 path with a ragged token count (exercises token zero-padding).
    params_bf16 = prepare_qwen3_moe_mlp_params(gate_w.astype(jnp.bfloat16),
                                               up_w.astype(jnp.bfloat16),
                                               down_w.astype(jnp.bfloat16))
    xb = jax.random.normal(kx, (2, 15, H), dtype=jnp.float32)
    out_bf = jax.block_until_ready(
        qwen3_moe_mlp(xb.astype(jnp.bfloat16), params_bf16))
    ref_bf = _reference(xb, gate_w, up_w, down_w)
    assert out_bf.shape == xb.shape
    assert jnp.allclose(out_bf.astype(jnp.float32), ref_bf, atol=5e-2, rtol=5e-2), \
        "bf16 mismatch vs reference"

    # 3) Forced decode split (exercises the v7x dual-TensorCore reduction path
    #    on whatever chip this runs on; on 1-core chips it is just a 2-step loop).
    H3, I3 = 64, 256
    kg3, ku3, kd3, kx3 = jax.random.split(jax.random.PRNGKey(1), 4)
    gw3 = jax.random.normal(kg3, (H3, I3), jnp.float32) * 0.05
    uw3 = jax.random.normal(ku3, (H3, I3), jnp.float32) * 0.05
    dw3 = jax.random.normal(kd3, (I3, H3), jnp.float32) * 0.05
    params3 = prepare_qwen3_moe_mlp_params(gw3, uw3, dw3)
    x3 = jax.random.normal(kx3, (1, 4, H3), dtype=jnp.float32)
    out3 = jax.block_until_ready(qwen3_moe_mlp(x3, params3, decode_split=True))
    ref3 = _reference(x3, gw3, uw3, dw3)
    assert out3.shape == x3.shape
    assert jnp.allclose(out3, ref3, atol=1e-4, rtol=1e-4), "decode-split mismatch"

    print("KERNEL_OK")
</pallas_src>

<mosaic_0001>
module attributes {stable_mosaic.version = 11 : i64} {
  func.func @_mlp_kernel(%arg0: i32, %arg1: i32, %arg2: memref<8x64xf32, #tpu.memory_space<vmem>>, %arg3: memref<2x64x128xf32, #tpu.memory_space<vmem>>, %arg4: memref<128x64xf32, #tpu.memory_space<vmem>>, %arg5: memref<8x64xf32, #tpu.memory_space<vmem>>) attributes {dimension_semantics = [#tpu.dimension_semantics<parallel>, #tpu.dimension_semantics<arbitrary>], iteration_bounds = array<i64: 2, 1>, scalar_prefetch = 0 : i64, scratch_operands = 0 : i64, tpu.core_type = #tpu.core_type<tc>, window_params = [{transform_indices = @transform_0, window_bounds = array<i64: 8, 64>}, {transform_indices = @transform_1, window_bounds = array<i64: 2, 64, 128>}, {transform_indices = @transform_2, window_bounds = array<i64: 128, 64>}, {transform_indices = @transform_3, window_bounds = array<i64: 8, 64>}]} {
    %c0 = arith.constant 0 : index
    %c0_0 = arith.constant 0 : index
    %0 = vector.load %arg2[%c0, %c0_0] : memref<8x64xf32, #tpu.memory_space<vmem>>, vector<8x64xf32>
    %c0_1 = arith.constant 0 : index
    %c0_2 = arith.constant 0 : index
    %c0_3 = arith.constant 0 : index
    %1 = vector.load %arg3[%c0_1, %c0_2, %c0_3] : memref<2x64x128xf32, #tpu.memory_space<vmem>>, vector<1x64x128xf32>
    %2 = vector.shape_cast %1 : vector<1x64x128xf32> to vector<64x128xf32>
    %cst = arith.constant dense<0.000000e+00> : vector<8x128xf32>
    %3 = tpu.matmul %0, %2, %cst {dimension_numbers = #tpu.dot_dimension_numbers<[1], [0], [0], [1], [0, 0, 1, 1], [], []>} : vector<8x64xf32>, vector<64x128xf32>, vector<8x128xf32> -> vector<8x128xf32>
    %c1 = arith.constant 1 : index
    %c0_4 = arith.constant 0 : index
    %c0_5 = arith.constant 0 : index
    %4 = vector.load %arg3[%c1, %c0_4, %c0_5] : memref<2x64x128xf32, #tpu.memory_space<vmem>>, vector<1x64x128xf32>
    %5 = vector.shape_cast %4 : vector<1x64x128xf32> to vector<64x128xf32>
    %cst_6 = arith.constant dense<0.000000e+00> : vector<8x128xf32>
    %6 = tpu.matmul %0, %5, %cst_6 {dimension_numbers = #tpu.dot_dimension_numbers<[1], [0], [0], [1], [0, 0, 1, 1], [], []>} : vector<8x64xf32>, vector<64x128xf32>, vector<8x128xf32> -> vector<8x128xf32>
    %7 = arith.negf %3 : vector<8x128xf32>
    %8 = math.exp %7 : vector<8x128xf32>
    %cst_7 = arith.constant 1.000000e+00 : f32
    %9 = vector.broadcast %cst_7 : f32 to vector<8x128xf32>
    %10 = arith.addf %9, %8 : vector<8x128xf32>
    %11 = arith.divf %9, %10 : vector<8x128xf32>
    %12 = arith.mulf %3, %11 : vector<8x128xf32>
    %13 = arith.mulf %12, %6 : vector<8x128xf32>
    %c0_8 = arith.constant 0 : index
    %c0_9 = arith.constant 0 : index
    %14 = vector.load %arg4[%c0_8, %c0_9] : memref<128x64xf32, #tpu.memory_space<vmem>>, vector<128x64xf32>
    %cst_10 = arith.constant dense<0.000000e+00> : vector<8x64xf32>
    %15 = tpu.matmul %13, %14, %cst_10 {dimension_numbers = #tpu.dot_dimension_numbers<[1], [0], [0], [1], [0, 0, 1, 1], [], []>} : vector<8x128xf32>, vector<128x64xf32>, vector<8x64xf32> -> vector<8x64xf32>
    %c0_11 = arith.constant 0 : index
    %c0_12 = arith.constant 0 : index
    %16 = vector.load %arg5[%c0_11, %c0_12] : memref<8x64xf32, #tpu.memory_space<vmem>>, vector<8x64xf32>
    tpu.vector_store %arg5[%c0_11, %c0_12], %15 {strides = array<i32>} : memref<8x64xf32, #tpu.memory_space<vmem>>, vector<8x64xf32>,
    return
  }
  func.func @transform_0(%arg0: i32, %arg1: i32) -> (i32, i32) {
    %c0_i32 = arith.constant 0 : i32
    %c0_i32_0 = arith.constant 0 : i32
    return %arg0, %c0_i32 : i32, i32
  }
  func.func @transform_1(%arg0: i32, %arg1: i32) -> (i32, i32, i32) {
    %c0_i32 = arith.constant 0 : i32
    %c0_i32_0 = arith.constant 0 : i32
    %c0_i32_1 = arith.constant 0 : i32
    return %c0_i32, %c0_i32_0, %arg1 : i32, i32, i32
  }
  func.func @transform_2(%arg0: i32, %arg1: i32) -> (i32, i32) {
    %c0_i32 = arith.constant 0 : i32
    %c0_i32_0 = arith.constant 0 : i32
    return %arg1, %c0_i32 : i32, i32
  }
  func.func @transform_3(%arg0: i32, %arg1: i32) -> (i32, i32) {
    %c0_i32 = arith.constant 0 : i32
    %c0_i32_0 = arith.constant 0 : i32
    return %arg0, %c0_i32 : i32, i32
  }
}

</mosaic_0001>

<llo_original>
// kernel: tpu_custom_call.1
$region0: #{tpu_custom_call.1}
  #allocation0 [shape = 'u32[]', space=smem, size = 0x4, offset = 0x4, fixed_abs, tag = 'smem constant byte address 0x4 - core index']
  #allocation1 [shape = 'u32[144,128]{1,0:T(1,128)}', space=vmem, size = 0x12000, scoped, tag = 'internal scratch']
  %s0 = inlined_call_operand.vmem [shape: f32[16,64], index: 0, kind: input, shape index: {}]
  %s1 = inlined_call_operand.vmem [shape: f32[2,64,128], index: 1, kind: input, shape index: {}]
  %s2 = inlined_call_operand.vmem [shape: f32[128,64], index: 2, kind: input, shape index: {}]
  %s3 = inlined_call_operand.hbm [shape: f32[16,64], index: 3, kind: output, shape index: {}]
  %s4 = sld [smem:[#allocation0]]
  $region45: #{tpu_custom_call.1} parent=0
    _
  %s6 = ssub.s32 1, %s4
  %s7 = scalar_select 0, %s6, %s4
  $region1: #{tpu_custom_call.1} parent=0
    #allocation2 [shape = 'u8[8192]{0}', space=vmem, size = 0x2000, scoped, tag = 'output window, operand 0']
    #allocation3 [shape = 's32[2]{0}', space=sflag, size = 0x8, scoped, tag = 'scoped memory for tpu_custom_call.1']
    %8 = vsyncpa [#allocation3], 0
    %s9 = scalar_lea.sflag [#allocation3], 1
    %10 = vsyncpa %s9, 0
    loop: start=0, step=1, limit=4
    $region2: #{tpu_custom_call.1} parent=1 // loop_pre_header
      _
    $region3: #{tpu_custom_call.1} parent=1 // loop_header
      %s12 = sphi 0, %s16
      %p13 = scmp.ge.s32.totalorder %s12, 4
      %s19 = sphi 0, %s31
      %s20 = sphi 0, %s27
      %s21 = sphi 0, %s19
      %s22 = sphi 0, %s20
      %s23 = sphi 0, %s21
      %s24 = sphi 0, %s22
      %s34 = sphi 0, %s36
      %s37 = sphi 0, %s34
      %s38 = sphi 0, %s37
      %s54 = sphi 0, %s38
      %s60 = sphi 0, %s62
      %s63 = sphi 0, %s60
      %s64 = sphi 0, %s63
      %s80 = sphi 0, %s64
      %s86 = sphi 0, %s88
      %s89 = sphi 0, %s86
      %s90 = sphi 0, %s89
      %s106 = sphi 0, %s90
      %s112 = sphi 0, %s114
      %s115 = sphi 0, %s112
      %s116 = sphi 0, %s115
      %s132 = sphi 0, %s116
    $region4: #{tpu_custom_call.1} parent=1 // loop_header_branch
      %15 = sbr.rel (%p13) target = $region8
    $region5: #{tpu_custom_call.1} parent=1 // loop_body
      %s17 = ssub.s32 %s12, 1
      %s18 = ssub.s32 %s12, 2
      %s25 = sadd.s32 1, %s20
      %p26 = scmp.ge.s32.totalorder %s25, 1
      %s27 = scalar_select %p26, 0, %s25
      %s28 = sadd.s32 1, %s19
      %s29 = scalar_select %p26, %s28, %s19
      %p30 = scmp.ge.s32.totalorder %s29, 2
      %s31 = scalar_select %p30, 0, %s29
      %s32 = ssub.s32 %s19, %s31
      %p33 = scmp.eq.s32.totalorder %s32, 0
      %s35 = sadd.s32 %s34, 1
      %s36 = scalar_select %p33, %s34, %s35
      %p39 = pneg %p33
      %p40 = scmp.eq.s32.totalorder %s12, 1
      %p41 = por %p39, %p40
      %p42 = scmp.ne.s32.totalorder %s34, %s37
      %p43 = scmp.eq.s32.totalorder %s12, 0
      %p44 = por %p42, %p43
      %p45 = scmp.ne.s32.totalorder %s34, %s37
      %p46 = scmp.eq.s32.totalorder %s17, 1
      %p47 = por %p45, %p46
      %p48 = scmp.ne.s32.totalorder %s37, %s38
      %p49 = scmp.eq.s32.totalorder %s17, 0
      %p50 = por %p48, %p49
      %p51 = scmp.ne.s32.totalorder %s37, %s38
      %p52 = scmp.eq.s32.totalorder %s18, 1
      %p53 = por %p51, %p52
      %p55 = scmp.ne.s32.totalorder %s38, %s54
      %p56 = scmp.eq.s32.totalorder %s18, 0
      %p57 = por %p55, %p56
      %s58 = ssub.s32 %s20, %s27
      %p59 = scmp.eq.s32.totalorder %s58, 0
      %s61 = sadd.s32 %s60, 1
      %s62 = scalar_select %p59, %s60, %s61
      %p65 = pneg %p59
      %p66 = scmp.eq.s32.totalorder %s12, 1
      %p67 = por %p65, %p66
      %p68 = scmp.ne.s32.totalorder %s60, %s63
      %p69 = scmp.eq.s32.totalorder %s12, 0
      %p70 = por %p68, %p69
      %p71 = scmp.ne.s32.totalorder %s60, %s63
      %p72 = scmp.eq.s32.totalorder %s17, 1
      %p73 = por %p71, %p72
      %p74 = scmp.ne.s32.totalorder %s63, %s64
      %p75 = scmp.eq.s32.totalorder %s17, 0
      %p76 = por %p74, %p75
      %p77 = scmp.ne.s32.totalorder %s63, %s64
      %p78 = scmp.eq.s32.totalorder %s18, 1
      %p79 = por %p77, %p78
      %p81 = scmp.ne.s32.totalorder %s64, %s80
      %p82 = scmp.eq.s32.totalorder %s18, 0
      %p83 = por %p81, %p82
      %s84 = ssub.s32 %s20, %s27
      %p85 = scmp.eq.s32.totalorder %s84, 0
      %s87 = sadd.s32 %s86, 1
      %s88 = scalar_select %p85, %s86, %s87
      %p91 = pneg %p85
      %p92 = scmp.eq.s32.totalorder %s12, 1
      %p93 = por %p91, %p92
      %p94 = scmp.ne.s32.totalorder %s86, %s89
      %p95 = scmp.eq.s32.totalorder %s12, 0
      %p96 = por %p94, %p95
      %p97 = scmp.ne.s32.totalorder %s86, %s89
      %p98 = scmp.eq.s32.totalorder %s17, 1
      %p99 = por %p97, %p98
      %p100 = scmp.ne.s32.totalorder %s89, %s90
      %p101 = scmp.eq.s32.totalorder %s17, 0
      %p102 = por %p100, %p101
      %p103 = scmp.ne.s32.totalorder %s89, %s90
      %p104 = scmp.eq.s32.totalorder %s18, 1
      %p105 = por %p103, %p104
      %p107 = scmp.ne.s32.totalorder %s90, %s106
      %p108 = scmp.eq.s32.totalorder %s18, 0
      %p109 = por %p107, %p108
      %s110 = ssub.s32 %s19, %s31
      %p111 = scmp.eq.s32.totalorder %s110, 0
      %s113 = sadd.s32 %s112, 1
      %s114 = scalar_select %p111, %s112, %s113
      %p117 = pneg %p111
      %p118 = scmp.eq.s32.totalorder %s12, 1
      %p119 = por %p117, %p118
      %p120 = scmp.ne.s32.totalorder %s112, %s115
      %p121 = scmp.eq.s32.totalorder %s12, 0
      %p122 = por %p120, %p121
      %p123 = scmp.ne.s32.totalorder %s112, %s115
      %p124 = scmp.eq.s32.totalorder %s17, 1
      %p125 = por %p123, %p124
      %p126 = scmp.ne.s32.totalorder %s115, %s116
      %p127 = scmp.eq.s32.totalorder %s17, 0
      %p128 = por %p126, %p127
      %p129 = scmp.ne.s32.totalorder %s115, %s116
      %p130 = scmp.eq.s32.totalorder %s18, 1
      %p131 = por %p129, %p130
      %p133 = scmp.ne.s32.totalorder %s116, %s132
      %p134 = scmp.eq.s32.totalorder %s18, 0
      %p135 = por %p133, %p134
      %p136 = scmp.le.s32.totalorder 1, %s12
      %p137 = scmp.lt.s32.totalorder %s12, 3
      %p138 = pnand %p136, %p137
      %p139 = pneg %p138
      // Predicated region
      $region9: #{tpu_custom_call.1} parent=5 // pred_check
        _
      $region10: #{tpu_custom_call.1} parent=5 // pred_check_branch
        %141 = sbr.rel (%p138) target = $region12
      $region11: #{tpu_custom_call.1} parent=5 // pred_region
        %s142 = ssub.s32 %s12, 1
        // Predicated region
        $region13: #{tpu_custom_call.1} parent=11 // pred_check
          %p143 = pneg %p76
        $region14: #{tpu_custom_call.1} parent=11 // pred_check_branch
          %145 = sbr.rel (%p143) target = $region16
        $region15: #{tpu_custom_call.1} parent=11 // pred_region
          %p146 = scmp.lt.s32.totalorder %s22, 0
          %s147 = scalar_select %p146, %s22, 0
          %s148 = smul.addr %s147, 8
          %s149 = scalar_lea.vmem %s1, %s148
        $region16: #{tpu_custom_call.1} parent=11 // pred_fallthru
          _
        // Predicated region
        $region17: #{tpu_custom_call.1} parent=11 // pred_check
          %p150 = pneg %p102
        $region18: #{tpu_custom_call.1} parent=11 // pred_check_branch
          %152 = sbr.rel (%p150) target = $region20
        $region19: #{tpu_custom_call.1} parent=11 // pred_region
          %s153 = smul.u32 16, %s22
          %p154 = scmp.lt.s32.totalorder %s153, 15
          %s155 = scalar_select %p154, %s153, 15
          %s156 = smul.addr %s155, 8
          %s157 = scalar_lea.vmem %s2, %s156
          %s158 = smul.u32 16, %s22
        $region20: #{tpu_custom_call.1} parent=11 // pred_fallthru
          _
      $region12: #{tpu_custom_call.1} parent=5 // pred_fallthru
        _
      %p159 = scmp.lt.s32.totalorder %s12, 2
      // Predicated region
      $region21: #{tpu_custom_call.1} parent=5 // pred_check
        %p160 = pneg %p159
      $region22: #{tpu_custom_call.1} parent=5 // pred_check_branch
        %162 = sbr.rel (%p160) target = $region24
      $region23: #{tpu_custom_call.1} parent=5 // pred_region
        // Predicated region
        $region25: #{tpu_custom_call.1} parent=23 // pred_check
          %p163 = pneg %p44
        $region26: #{tpu_custom_call.1} parent=23 // pred_check_branch
          %165 = sbr.rel (%p163) target = $region28
        $region27: #{tpu_custom_call.1} parent=23 // pred_region
          %p166 = scmp.lt.s32.totalorder %s19, 1
          %s167 = scalar_select %p166, %s19, 1
          %s168 = smul.addr %s167, 8
          %s169 = scalar_lea.vmem %s0, %s168
        $region28: #{tpu_custom_call.1} parent=23 // pred_fallthru
          _
      $region24: #{tpu_custom_call.1} parent=5 // pred_fallthru
        _
      %p170 = scmp.le.s32.totalorder 1, %s12
      %p171 = scmp.lt.s32.totalorder %s12, 3
      %p172 = pnand %p170, %p171
      %p173 = pneg %p172
      // Predicated region
      $region29: #{tpu_custom_call.1} parent=5 // pred_check
        _
      $region30: #{tpu_custom_call.1} parent=5 // pred_check_branch
        %175 = sbr.rel (%p172) target = $region32
      $region31: #{tpu_custom_call.1} parent=5 // pred_region
        %s176 = ssub.s32 %s12, 1
        %p177 = scmp.lt.s32.totalorder %s21, 1
        %s178 = scalar_select %p177, %s21, 1
        %s179 = smul.addr %s178, 8
        %s180 = scalar_lea.vmem %s0, %s179
        %p181 = pneg %p50
        %p182 = pneg %p47
        %p183 = scmp.lt.s32.totalorder %s22, 0
        %s184 = scalar_select %p183, %s22, 0
        %s185 = smul.addr %s184, 8
        %s186 = scalar_lea.vmem %s1, %s185
        %p187 = pneg %p76
        %p188 = pneg %p73
        %s189 = smul.u32 16, %s22
        %p190 = scmp.lt.s32.totalorder %s189, 15
        %s191 = scalar_select %p190, %s189, 15
        %s192 = smul.addr %s191, 8
        %s193 = scalar_lea.vmem %s2, %s192
        %p194 = pneg %p102
        %p195 = pneg %p99
        %p196 = pneg %p128
        %p197 = pneg %p125
        %s198 = sand.u32 %s115, 1
        %s199 = scalar_lea.sflag [#allocation3], %s198
        %s200 = sand.u32 %s115, 1
        %s201 = smul.addr %s200, 8
        %s202 = scalar_lea.vmem [#allocation2], %s201
        %p203 = scmp.lt.s32.totalorder %s21, 1
        %s204 = scalar_select %p203, %s21, 1
        %s205 = smul.addr %s204, 8
        %s206 = scalar_lea.vmem %s0, %s205
        %p207 = scmp.lt.s32.totalorder %s22, 0
        %s208 = scalar_select %p207, %s22, 0
        %s209 = smul.addr %s208, 8
        %s210 = scalar_lea.vmem %s1, %s209
        %s211 = smul.u32 16, %s22
        %p212 = scmp.lt.s32.totalorder %s211, 15
        %s213 = scalar_select %p212, %s211, 15
        %s214 = smul.addr %s213, 8
        %s215 = scalar_lea.vmem %s2, %s214
        %s216 = smul.u32 16, %s22
        %v217 = vld [vmem:[%s206] sm:$0xff]
        %v218 = vld [vmem:[%s210] sm:$0xff]
        %v219 = vld [vmem:[%s210 + $0x8] sm:$0xff]
        %v220 = vld [vmem:[%s210 + $0x10] sm:$0xff]
        %v221 = vld [vmem:[%s210 + $0x18] sm:$0xff]
        %v222 = vld [vmem:[%s210 + $0x20] sm:$0xff]
        %v223 = vld [vmem:[%s210 + $0x28] sm:$0xff]
        %v224 = vld [vmem:[%s210 + $0x30] sm:$0xff]
        %v225 = vld [vmem:[%s210 + $0x38] sm:$0xff]
        %vm226 = vcmask 523264
        %v228 = vsel %vm226, %v217, 0
        %230 = vmatprep.subr.mxu0 0.0
        %231 = vmatpush1.msra.mxu0 0.0
        %232 = vmatprep.subr.mxu0 0.0
        %233 = vmatpush1.msra.mxu0 0.0
        %234 = vmatprep.subr.mxu0 0.0
        %235 = vmatpush1.msra.mxu0 0.0
        %236 = vmatprep.subr.mxu0 0.0
        %237 = vmatpush1.msra.mxu0 0.0
        %238 = vmatprep.subr.mxu0 0.0
        %239 = vmatpush1.msra.mxu0 0.0
        %240 = vmatprep.subr.mxu0 0.0
        %241 = vmatpush1.msra.mxu0 0.0
        %242 = vmatprep.subr.mxu0 0.0
        %243 = vmatpush1.msra.mxu0 0.0
        %244 = vmatprep.subr.mxu0 0.0
        %245 = vmatpush1.msra.mxu0 0.0
        %246 = vmatprep.subr.mxu0 0.0
        %247 = vmatpush1.msra.mxu0 %v225
        %248 = vmatprep.subr.mxu0 0.0
        %249 = vmatpush1.msra.mxu0 %v224
        %250 = vmatprep.subr.mxu0 0.0
        %251 = vmatpush1.msra.mxu0 %v223
        %252 = vmatprep.subr.mxu0 0.0
        %253 = vmatpush1.msra.mxu0 %v222
        %254 = vmatprep.subr.mxu0 0.0
        %255 = vmatpush1.msra.mxu0 %v221
        %256 = vmatprep.subr.mxu0 0.0
        %257 = vmatpush1.msra.mxu0 %v220
        %258 = vmatprep.subr.mxu0 0.0
        %259 = vmatpush1.msra.mxu0 %v219
        %260 = vmatprep.subr.mxu0 0.0
        %261 = vmatpush1.msra.mxu0 %v218
        %262 = vmatprep.subr.mxu0 0.0
        %263 = vmatpush2.msra.mxu0 0.0
        %264 = vmatprep.subr.mxu0 0.0
        %265 = vmatpush2.msra.mxu0 0.0
        %266 = vmatprep.subr.mxu0 0.0
        %267 = vmatpush2.msra.mxu0 0.0
        %268 = vmatprep.subr.mxu0 0.0
        %269 = vmatpush2.msra.mxu0 0.0
        %270 = vmatprep.subr.mxu0 0.0
        %271 = vmatpush2.msra.mxu0 0.0
        %272 = vmatprep.subr.mxu0 0.0
        %273 = vmatpush2.msra.mxu0 0.0
        %274 = vmatprep.subr.mxu0 0.0
        %275 = vmatpush2.msra.mxu0 0.0
        %276 = vmatprep.subr.mxu0 0.0
        %277 = vmatpush2.msra.mxu0 0.0
        %278 = vmatprep.subr.mxu0 0.0
        %279 = vmatpush2.msra.mxu0 0.0
        %280 = vmatprep.subr.mxu0 0.0
        %281 = vmatpush2.msra.mxu0 0.0
        %282 = vmatprep.subr.mxu0 0.0
        %283 = vmatpush2.msra.mxu0 0.0
        %284 = vmatprep.subr.mxu0 0.0
        %285 = vmatpush2.msra.mxu0 0.0
        %286 = vmatprep.subr.mxu0 0.0
        %287 = vmatpush2.msra.mxu0 0.0
        %288 = vmatprep.subr.mxu0 0.0
        %289 = vmatpush2.msra.mxu0 0.0
        %290 = vmatprep.subr.mxu0 0.0
        %291 = vmatpush2.msra.mxu0 0.0
        %292 = vmatprep.subr.mxu0 0.0
        %293 = vmatpush2.msra.mxu0 0.0
        %294 = vmatprep.mubr.f32.mxu0 0.0
        %295 = vmatmul.mubr.f32.gmra.mxu0 %v228
        %v296 = vpop.f32.mrf.mxu0
        %v297 = vadd.f32 0.0, %v296
        %v298 = vpop.f32.mrf.mxu0
        %299 = vdwg.mxu0
        %s300 = scalar_lea.vmem %s210, 64
        %v301 = vld [vmem:[%s300] sm:$0xff]
        %v302 = vld [vmem:[%s300 + $0x8] sm:$0xff]
        %v303 = vld [vmem:[%s300 + $0x10] sm:$0xff]
        %v304 = vld [vmem:[%s300 + $0x18] sm:$0xff]
        %v305 = vld [vmem:[%s300 + $0x20] sm:$0xff]
        %v306 = vld [vmem:[%s300 + $0x28] sm:$0xff]
        %v307 = vld [vmem:[%s300 + $0x30] sm:$0xff]
        %v308 = vld [vmem:[%s300 + $0x38] sm:$0xff]
        %309 = vmatprep.subr.mxu0 0.0
        %310 = vmatpush1.msra.mxu0 0.0
        %311 = vmatprep.subr.mxu0 0.0
        %312 = vmatpush1.msra.mxu0 0.0
        %313 = vmatprep.subr.mxu0 0.0
        %314 = vmatpush1.msra.mxu0 0.0
        %315 = vmatprep.subr.mxu0 0.0
        %316 = vmatpush1.msra.mxu0 0.0
        %317 = vmatprep.subr.mxu0 0.0
        %318 = vmatpush1.msra.mxu0 0.0
        %319 = vmatprep.subr.mxu0 0.0
        %320 = vmatpush1.msra.mxu0 0.0
        %321 = vmatprep.subr.mxu0 0.0
        %322 = vmatpush1.msra.mxu0 0.0
        %323 = vmatprep.subr.mxu0 0.0
        %324 = vmatpush1.msra.mxu0 0.0
        %325 = vmatprep.subr.mxu0 0.0
        %326 = vmatpush1.msra.mxu0 %v308
        %327 = vmatprep.subr.mxu0 0.0
        %328 = vmatpush1.msra.mxu0 %v307
        %329 = vmatprep.subr.mxu0 0.0
        %330 = vmatpush1.msra.mxu0 %v306
        %331 = vmatprep.subr.mxu0 0.0
        %332 = vmatpush1.msra.mxu0 %v305
        %333 = vmatprep.subr.mxu0 0.0
        %334 = vmatpush1.msra.mxu0 %v304
        %335 = vmatprep.subr.mxu0 0.0
        %336 = vmatpush1.msra.mxu0 %v303
        %337 = vmatprep.subr.mxu0 0.0
        %338 = vmatpush1.msra.mxu0 %v302
        %339 = vmatprep.subr.mxu0 0.0
        %340 = vmatpush1.msra.mxu0 %v301
        %341 = vmatprep.subr.mxu0 0.0
        %342 = vmatpush2.msra.mxu0 0.0
        %343 = vmatprep.subr.mxu0 0.0
        %344 = vmatpush2.msra.mxu0 0.0
        %345 = vmatprep.subr.mxu0 0.0
        %346 = vmatpush2.msra.mxu0 0.0
        %347 = vmatprep.subr.mxu0 0.0
        %348 = vmatpush2.msra.mxu0 0.0
        %349 = vmatprep.subr.mxu0 0.0
        %350 = vmatpush2.msra.mxu0 0.0
        %351 = vmatprep.subr.mxu0 0.0
        %352 = vmatpush2.msra.mxu0 0.0
        %353 = vmatprep.subr.mxu0 0.0
        %354 = vmatpush2.msra.mxu0 0.0
        %355 = vmatprep.subr.mxu0 0.0
        %356 = vmatpush2.msra.mxu0 0.0
        %357 = vmatprep.subr.mxu0 0.0
        %358 = vmatpush2.msra.mxu0 0.0
        %359 = vmatprep.subr.mxu0 0.0
        %360 = vmatpush2.msra.mxu0 0.0
        %361 = vmatprep.subr.mxu0 0.0
        %362 = vmatpush2.msra.mxu0 0.0
        %363 = vmatprep.subr.mxu0 0.0
        %364 = vmatpush2.msra.mxu0 0.0
        %365 = vmatprep.subr.mxu0 0.0
        %366 = vmatpush2.msra.mxu0 0.0
        %367 = vmatprep.subr.mxu0 0.0
        %368 = vmatpush2.msra.mxu0 0.0
        %369 = vmatprep.subr.mxu0 0.0
        %370 = vmatpush2.msra.mxu0 0.0
        %371 = vmatprep.subr.mxu0 0.0
        %372 = vmatpush2.msra.mxu0 0.0
        %373 = vmatprep.mubr.f32.mxu0 0.0
        %374 = vmatmul.mubr.f32.gmra.mxu0 %v228
        %v375 = vpop.f32.mrf.mxu0
        %v376 = vadd.f32 0.0, %v375
        %v377 = vpop.f32.mrf.mxu0
        %378 = vdwg.mxu0
        %v379 = vxor.u32 %v297, 2147483648
        %v380 = vmul.f32 %v379, 1.442695
        %v381 = vpow.pop %v380
        %v382 = vadd.f32 %v381, 1.0
        %v383 = vrcp.pop %v382
        %v384 = vmul.f32 1.0, %v383
        %v385 = vmul.f32 %v297, %v384
        %v386 = vmul.f32 %v385, %v376
        %v387 = vld [vmem:[%s215] sm:$0xff]
        %v388 = vld [vmem:[%s215 + $0x8] sm:$0xff]
        %v389 = vld [vmem:[%s215 + $0x10] sm:$0xff]
        %v390 = vld [vmem:[%s215 + $0x18] sm:$0xff]
        %v391 = vld [vmem:[%s215 + $0x20] sm:$0xff]
        %v392 = vld [vmem:[%s215 + $0x28] sm:$0xff]
        %v393 = vld [vmem:[%s215 + $0x30] sm:$0xff]
        %v394 = vld [vmem:[%s215 + $0x38] sm:$0xff]
        %v395 = vld [vmem:[%s215 + $0x40] sm:$0xff]
        %v396 = vld [vmem:[%s215 + $0x48] sm:$0xff]
        %v397 = vld [vmem:[%s215 + $0x50] sm:$0xff]
        %v398 = vld [vmem:[%s215 + $0x58] sm:$0xff]
        %v399 = vld [vmem:[%s215 + $0x60] sm:$0xff]
        %v400 = vld [vmem:[%s215 + $0x68] sm:$0xff]
        %v401 = vld [vmem:[%s215 + $0x70] sm:$0xff]
        %v402 = vld [vmem:[%s215 + $0x78] sm:$0xff]
        %403 = vmatprep.subr.mxu0 0.0
        %404 = vmatpush1.msra.mxu0 %v402
        %405 = vmatprep.subr.mxu0 0.0
        %406 = vmatpush1.msra.mxu0 %v401
        %407 = vmatprep.subr.mxu0 0.0
        %408 = vmatpush1.msra.mxu0 %v400
        %409 = vmatprep.subr.mxu0 0.0
        %410 = vmatpush1.msra.mxu0 %v399
        %411 = vmatprep.subr.mxu0 0.0
        %412 = vmatpush1.msra.mxu0 %v398
        %413 = vmatprep.subr.mxu0 0.0
        %414 = vmatpush1.msra.mxu0 %v397
        %415 = vmatprep.subr.mxu0 0.0
        %416 = vmatpush1.msra.mxu0 %v396
        %417 = vmatprep.subr.mxu0 0.0
        %418 = vmatpush1.msra.mxu0 %v395
        %419 = vmatprep.subr.mxu0 0.0
        %420 = vmatpush1.msra.mxu0 %v394
        %421 = vmatprep.subr.mxu0 0.0
        %422 = vmatpush1.msra.mxu0 %v393
        %423 = vmatprep.subr.mxu0 0.0
        %424 = vmatpush1.msra.mxu0 %v392
        %425 = vmatprep.subr.mxu0 0.0
        %426 = vmatpush1.msra.mxu0 %v391
        %427 = vmatprep.subr.mxu0 0.0
        %428 = vmatpush1.msra.mxu0 %v390
        %429 = vmatprep.subr.mxu0 0.0
        %430 = vmatpush1.msra.mxu0 %v389
        %431 = vmatprep.subr.mxu0 0.0
        %432 = vmatpush1.msra.mxu0 %v388
        %433 = vmatprep.subr.mxu0 0.0
        %434 = vmatpush1.msra.mxu0 %v387
        %435 = vmatprep.subr.mxu0 0.0
        %436 = vmatpush2.msra.mxu0 0.0
        %437 = vmatprep.subr.mxu0 0.0
        %438 = vmatpush2.msra.mxu0 0.0
        %439 = vmatprep.subr.mxu0 0.0
        %440 = vmatpush2.msra.mxu0 0.0
        %441 = vmatprep.subr.mxu0 0.0
        %442 = vmatpush2.msra.mxu0 0.0
        %443 = vmatprep.subr.mxu0 0.0
        %444 = vmatpush2.msra.mxu0 0.0
        %445 = vmatprep.subr.mxu0 0.0
        %446 = vmatpush2.msra.mxu0 0.0
        %447 = vmatprep.subr.mxu0 0.0
        %448 = vmatpush2.msra.mxu0 0.0
        %449 = vmatprep.subr.mxu0 0.0
        %450 = vmatpush2.msra.mxu0 0.0
        %451 = vmatprep.subr.mxu0 0.0
        %452 = vmatpush2.msra.mxu0 0.0
        %453 = vmatprep.subr.mxu0 0.0
        %454 = vmatpush2.msra.mxu0 0.0
        %455 = vmatprep.subr.mxu0 0.0
        %456 = vmatpush2.msra.mxu0 0.0
        %457 = vmatprep.subr.mxu0 0.0
        %458 = vmatpush2.msra.mxu0 0.0
        %459 = vmatprep.subr.mxu0 0.0
        %460 = vmatpush2.msra.mxu0 0.0
        %461 = vmatprep.subr.mxu0 0.0
        %462 = vmatpush2.msra.mxu0 0.0
        %463 = vmatprep.subr.mxu0 0.0
        %464 = vmatpush2.msra.mxu0 0.0
        %465 = vmatprep.subr.mxu0 0.0
        %466 = vmatpush2.msra.mxu0 0.0
        %467 = vmatprep.mubr.f32.mxu0 0.0
        %468 = vmatmul.mubr.f32.gmra.mxu0 %v386
        %v469 = vpop.f32.mrf.mxu0
        %v470 = vadd.f32 0.0, %v469
        %v471 = vpop.f32.mrf.mxu0
        %472 = vdwg.mxu0
        %473 = vst.msk [vmem:[%s202] sm:$0xff] %vm226, %v470
        %s474 = sand.u32 %s115, 1
        %s475 = scalar_lea.sflag [#allocation3], %s474
        %s476 = sand.u32 %s115, 1
        %s477 = smul.addr %s476, 8
        %s478 = scalar_lea.vmem [#allocation2], %s477
        // Predicated region
        $region33: #{tpu_custom_call.1} parent=31 // pred_check
          %p479 = pneg %p125
        $region34: #{tpu_custom_call.1} parent=31 // pred_check_branch
          %481 = sbr.rel (%p479) target = $region36
        $region35: #{tpu_custom_call.1} parent=31 // pred_region
          %s483 = ssub.s32 128, 128
          %484 = vsyncadd %s475, %s483
          %s485 = smul.addr %s21, 128
          %s486 = scalar_lea.hbm %s3, %s485
          %s488 = sshll.u32 %s478, 4
          %s489 = int_to_ptr.vmem [resolvable:$true] %s488
          %491 = dma.vmem_to_hbm [thread:$0]  %s489, 128, %s486, %s475
        $region36: #{tpu_custom_call.1} parent=31 // pred_fallthru
          _
      $region32: #{tpu_custom_call.1} parent=5 // pred_fallthru
        _
      %p492 = scmp.le.s32.totalorder 2, %s12
      // Predicated region
      $region37: #{tpu_custom_call.1} parent=5 // pred_check
        %p493 = pneg %p492
      $region38: #{tpu_custom_call.1} parent=5 // pred_check_branch
        %495 = sbr.rel (%p493) target = $region40
      $region39: #{tpu_custom_call.1} parent=5 // pred_region
        %s496 = ssub.s32 %s12, 2
        // Predicated region
        $region41: #{tpu_custom_call.1} parent=39 // pred_check
          %p497 = pneg %p131
        $region42: #{tpu_custom_call.1} parent=39 // pred_check_branch
          %499 = sbr.rel (%p497) target = $region44
        $region43: #{tpu_custom_call.1} parent=39 // pred_region
          %s500 = sand.u32 %s116, 1
          %s501 = scalar_lea.sflag [#allocation3], %s500
          %s502 = sand.u32 %s116, 1
          %s503 = smul.addr %s502, 8
          %s504 = scalar_lea.vmem [#allocation2], %s503
          %505 = dma.done %s501, 128
        $region44: #{tpu_custom_call.1} parent=39 // pred_fallthru
          _
      $region40: #{tpu_custom_call.1} parent=5 // pred_fallthru
        _
    $region6: #{tpu_custom_call.1} parent=1 // loop_footer
      %s16 = sadd.s32 1, %s12
    $region7: #{tpu_custom_call.1} parent=1 // loop_footer_branch
      %11 = sbr.rel target = $region3
    $region8: #{tpu_custom_call.1} parent=1 // loop_exit
      _
    %506 = vsyncpa [#allocation3], 1
    %s507 = scalar_lea.sflag [#allocation3], 1
    %508 = vsyncpa %s507, 1

</llo_original>
